<compile_context>
chip_gen: v7x
topology: tpu7x:2x2x1
jax: 0.10.0
libtpu: 0.0.40
codegen_flags: <defaults>
</compile_context>

<pallas_src>
import jax
import jax.numpy as jnp
from jax.experimental import pallas as pl
from jax.experimental.pallas import tpu as pltpu


def _layer_scaler_kernel(g_ref, x_ref, o_ref):
    # g_ref: VMEM (TR, 1) per-row scale; x_ref / o_ref: VMEM (TR, TL) tiles.
    # The (TR, 1) scale broadcasts across lanes on the VPU; the product is
    # computed in the promoted dtype (f32 when gamma is f32) and cast down to
    # the activation dtype for the lane-dense store.
    o_ref[...] = (g_ref[...] * x_ref[...]).astype(o_ref.dtype)


def _choose_tiles(rows, lanes, in_itemsize, out_itemsize, gamma_itemsize):
    """Pick a (TR, TL) tile honoring the (8,128) rule and the VMEM budget."""
    # dtype-native sublane multiple: 8 (f32) / 16 (bf16) / 32 (int8/fp8)
    sub = max(8, 32 // in_itemsize)

    target_bytes = 2 << 20     # ~2 MiB input tile: near peak of the measured
                               # roofline curve, half the grid steps of 1 MiB
    max_tile_bytes = 3 << 20   # cap so double-buffered in+out+gamma < ~14 MiB
                               # -> safe under v5e's 16 MiB scoped-VMEM default
                               # (v6e/v7x scoped defaults are 32 MiB)

    # Lane (last) dim: prefer the full spatial extent (always layout-legal,
    # lane-dense stores).  Only tile it, in multiples of 128, if a minimal
    # sublane-height slab would already blow the per-tile budget.
    if sub * lanes * in_itemsize > max_tile_bytes and lanes > 512:
        tl = (max_tile_bytes // (sub * in_itemsize)) // 128 * 128
        tl = max(128, min(tl, (lanes // 128) * 128))
    else:
        tl = lanes

    # Row dim: aim for ~target_bytes of input per tile, clamped so the full
    # double-buffered working set — in tile + out tile + lane-padded gamma
    # block ((tr,1) occupies tr*128 lanes in VMEM), x2 buffers each — stays
    # under ~14 MiB.
    bytes_per_row = tl * (in_itemsize + out_itemsize) + 128 * gamma_itemsize
    tr = max(1, target_bytes // max(1, tl * in_itemsize))
    tr = min(tr, max(sub, (14 << 20) // (2 * bytes_per_row)))
    if tr >= rows:
        return rows, tl
    tr = max(sub, (tr // sub) * sub)
    return tr, tl


def _even_row_tiles(rows, tr, sub):
    """Prefer an even row-tile count so v7x's two TensorCores split evenly."""
    nt = -(-rows // tr)
    if nt <= 1 or nt % 2 == 0:
        return tr
    new_tr = -(-rows // (nt + 1))
    new_tr = max(sub, -(-new_tr // sub) * sub)
    if new_tr < tr and (-(-rows // new_tr)) % 2 == 0:
        return new_tr
    return tr


def layer_scaler(x: jax.Array, gamma: jax.Array, *, donate_x: bool = False) -> jax.Array:
    """Computes gamma[None, :, None, None] * x for x in NCHW."""
    N, C, H, W = x.shape
    assert gamma.shape == (C,)

    # Keep the activation dtype on the output (avoids +100% write-stream bytes
    # when x is bf16 and gamma is f32).  Identical to the PyTorch module when
    # gamma and x share a dtype (its default construction: f32 * f32).
    out_dtype = x.dtype
    out_itemsize = jnp.dtype(out_dtype).itemsize

    R, L = N * C, H * W

    # Tiny spatial planes: masked sub-128-lane stores + launch overhead lose
    # to a fused XLA multiply — fall back and let XLA fuse it.
    if L < 128:
        return (gamma[None, :, None, None] * x).astype(out_dtype)

    x2 = x.reshape(R, L)                    # free: contiguous reshape
    g2 = jnp.tile(gamma, N).reshape(R, 1)   # per-row scale (tiny, O(N*C))

    tr, tl = _choose_tiles(R, L, x.dtype.itemsize, out_itemsize,
                           gamma.dtype.itemsize)

    cost = pl.CostEstimate(
        flops=R * L,
        transcendentals=0,
        bytes_accessed=R * L * (x.dtype.itemsize + out_itemsize)
        + R * gamma.dtype.itemsize,
    )
    # Aliasing x's HBM buffer only pays off when the caller donates x
    # (otherwise XLA inserts a defensive copy).
    io_aliases = {1: 0} if donate_x else {}
    # TODO(synk): the biggest absolute win is fusing this HBM-bound multiply
    # into its producer/consumer op rather than running it standalone.

    if tl == L:
        # Common case: one lane-dense row-slab per step -> 1-D grid, no dead
        # lane axis; nudge the tile count even for v7x's two TensorCores.
        tr = _even_row_tiles(R, tr, max(8, 32 // x.dtype.itemsize))
        grid = (pl.cdiv(R, tr),)
        in_specs = [
            pl.BlockSpec((tr, 1), lambda i: (i, 0)),     # per-row scale
            pl.BlockSpec((tr, tl), lambda i: (i, 0)),    # lane-dense x tile
        ]
        out_specs = pl.BlockSpec((tr, tl), lambda i: (i, 0))
        dims = ("parallel",)
    else:
        # Huge spatial plane: tile lanes too.  j is the inner axis, so the
        # (i, 0) gamma block is reused (not re-DMA'd) across the j steps.
        grid = (pl.cdiv(R, tr), pl.cdiv(L, tl))
        in_specs = [
            pl.BlockSpec((tr, 1), lambda i, j: (i, 0)),
            pl.BlockSpec((tr, tl), lambda i, j: (i, j)),
        ]
        out_specs = pl.BlockSpec((tr, tl), lambda i, j: (i, j))
        dims = ("parallel", "parallel")

    out2 = pl.pallas_call(
        _layer_scaler_kernel,
        out_shape=jax.ShapeDtypeStruct((R, L), out_dtype),
        grid_spec=pltpu.PrefetchScalarGridSpec(
            num_scalar_prefetch=0,
            grid=grid,
            in_specs=in_specs,
            out_specs=out_specs,
        ),
        compiler_params=pltpu.CompilerParams(dimension_semantics=dims),
        cost_estimate=cost,
        input_output_aliases=io_aliases,
    )(g2, x2)

    return out2.reshape(N, C, H, W)


if __name__ == "__main__":
    # Deterministic parameter init, mirroring nn.Parameter(init_value * ones(C)).
    init_value = 1e-2
    N, C, H, W = 2, 4, 16, 16

    gamma = init_value * jnp.ones((C,), dtype=jnp.float32)

    key = jax.random.PRNGKey(0)
    x = jax.random.normal(key, (N, C, H, W), dtype=jnp.float32)

    out = layer_scaler(x, gamma)
    out = jax.block_until_ready(out)

    # Reference check against plain JAX broadcasting semantics.
    expected = gamma[None, :, None, None] * x
    assert out.shape == expected.shape and out.dtype == expected.dtype
    assert jnp.allclose(out, expected, atol=1e-6, rtol=1e-6)

    print("KERNEL_OK")
</pallas_src>

<mosaic_0001>
module attributes {stable_mosaic.version = 11 : i64} {
  func.func @_layer_scaler_kernel(%arg0: i32, %arg1: memref<8x1xf32, #tpu.memory_space<vmem>>, %arg2: memref<8x256xf32, #tpu.memory_space<vmem>>, %arg3: memref<8x256xf32, #tpu.memory_space<vmem>>) attributes {dimension_semantics = [#tpu.dimension_semantics<parallel>], iteration_bounds = array<i64: 1>, scalar_prefetch = 0 : i64, scratch_operands = 0 : i64, tpu.core_type = #tpu.core_type<tc>, window_params = [{transform_indices = @transform_0, window_bounds = array<i64: 8, 1>}, {transform_indices = @transform_1, window_bounds = array<i64: 8, 256>}, {transform_indices = @transform_2, window_bounds = array<i64: 8, 256>}]} {
    %c0 = arith.constant 0 : index
    %c0_0 = arith.constant 0 : index
    %0 = vector.load %arg1[%c0, %c0_0] : memref<8x1xf32, #tpu.memory_space<vmem>>, vector<8x1xf32>
    %c0_1 = arith.constant 0 : index
    %c0_2 = arith.constant 0 : index
    %1 = vector.load %arg2[%c0_1, %c0_2] : memref<8x256xf32, #tpu.memory_space<vmem>>, vector<8x256xf32>
    %2 = vector.broadcast %0 : vector<8x1xf32> to vector<8x256xf32>
    %3 = arith.mulf %2, %1 : vector<8x256xf32>
    %c0_3 = arith.constant 0 : index
    %c0_4 = arith.constant 0 : index
    %4 = vector.load %arg3[%c0_3, %c0_4] : memref<8x256xf32, #tpu.memory_space<vmem>>, vector<8x256xf32>
    tpu.vector_store %arg3[%c0_3, %c0_4], %3 {strides = array<i32>} : memref<8x256xf32, #tpu.memory_space<vmem>>, vector<8x256xf32>,
    return
  }
  func.func @transform_0(%arg0: i32) -> (i32, i32) {
    %c0_i32 = arith.constant 0 : i32
    %c0_i32_0 = arith.constant 0 : i32
    return %arg0, %c0_i32 : i32, i32
  }
  func.func @transform_1(%arg0: i32) -> (i32, i32) {
    %c0_i32 = arith.constant 0 : i32
    %c0_i32_0 = arith.constant 0 : i32
    return %arg0, %c0_i32 : i32, i32
  }
  func.func @transform_2(%arg0: i32) -> (i32, i32) {
    %c0_i32 = arith.constant 0 : i32
    %c0_i32_0 = arith.constant 0 : i32
    return %arg0, %c0_i32 : i32, i32
  }
}

</mosaic_0001>

<llo_original>
// kernel: tpu_custom_call.1
$region0: #{tpu_custom_call.1}
  #allocation0 [shape = 'u32[]', space=smem, size = 0x4, offset = 0x4, fixed_abs, tag = 'smem constant byte address 0x4 - core index']
  #allocation1 [shape = 'u32[144,128]{1,0:T(1,128)}', space=vmem, size = 0x12000, scoped, tag = 'internal scratch']
  %s0 = inlined_call_operand.vmem [shape: f32[8,1], index: 0, kind: input, shape index: {}]
  %s1 = inlined_call_operand.hbm [shape: f32[8,256], index: 1, kind: input, shape index: {}]
  %s2 = inlined_call_operand.hbm [shape: f32[8,256], index: 2, kind: output, shape index: {}]
  %s3 = sld [smem:[#allocation0]]
  $region22: #{tpu_custom_call.1} parent=0
    _
  %s5 = ssub.s32 1, %s3
  %s6 = scalar_select 0, %s5, %s3
  $region1: #{tpu_custom_call.1} parent=0
    #allocation2 [shape = 'u8[8192]{0}', space=vmem, size = 0x2000, scoped, tag = 'input window, operand 1, single buffered']
    #allocation3 [shape = 's32[1]{0}', space=sflag, size = 0x4, scoped, tag = 'scoped memory for tpu_custom_call.1']
    #allocation4 [shape = 's32[1]{0}', space=sflag, size = 0x4, scoped, tag = 'scoped memory for tpu_custom_call.1']
    #allocation5 [shape = 'u8[8192]{0}', space=vmem, size = 0x2000, scoped, tag = 'output window, operand 0, single buffered']
    %7 = vsyncpa [#allocation3], 0
    %8 = vsyncpa [#allocation4], 0
    // Predicated region
    $region2: #{tpu_custom_call.1} parent=1 // pred_check
      _
    $region3: #{tpu_custom_call.1} parent=1 // pred_check_branch
      %10 = sbr.rel (0) target = $region5
    $region4: #{tpu_custom_call.1} parent=1 // pred_region
      _
    $region5: #{tpu_custom_call.1} parent=1 // pred_fallthru
      _
    // Predicated region
    $region6: #{tpu_custom_call.1} parent=1 // pred_check
      _
    $region7: #{tpu_custom_call.1} parent=1 // pred_check_branch
      %12 = sbr.rel (0) target = $region9
    $region8: #{tpu_custom_call.1} parent=1 // pred_region
      %s14 = ssub.s32 256, 256
      %15 = vsyncadd [#allocation3], %s14
      %s17 = sshll.u32 [#allocation2], 4
      %s18 = int_to_ptr.vmem [resolvable:$true] %s17
      %20 = dma.hbm_to_vmem [thread:$0]  %s1, 256, %s18, [#allocation3]
    $region9: #{tpu_custom_call.1} parent=1 // pred_fallthru
      _
    // Predicated region
    $region10: #{tpu_custom_call.1} parent=1 // pred_check
      _
    $region11: #{tpu_custom_call.1} parent=1 // pred_check_branch
      %22 = sbr.rel (0) target = $region13
    $region12: #{tpu_custom_call.1} parent=1 // pred_region
      %23 = dma.done [#allocation3], 256
    $region13: #{tpu_custom_call.1} parent=1 // pred_fallthru
      _
    %v24 = vld [vmem:[%s0] sm:$0xff]
    %v25 = vld [vmem:[#allocation2] sm:$0xff]
    %v26 = vld [vmem:[#allocation2 + $0x8] sm:$0xff]
    %28 = vset.pattern.permute.xlu0 0
    %29 = vperm.xlu0 %28, %v24
    %v30 = vpop.permute.xlu0 %29
    %v32 = vmul.f32 %v30, %v25
    %v33 = vmul.f32 %v30, %v26
    %34 = vst [vmem:[#allocation5] sm:$0xff] %v32
    %35 = vst [vmem:[#allocation5 + $0x8] sm:$0xff] %v33
    // Predicated region
    $region14: #{tpu_custom_call.1} parent=1 // pred_check
      _
    $region15: #{tpu_custom_call.1} parent=1 // pred_check_branch
      %37 = sbr.rel (0) target = $region17
    $region16: #{tpu_custom_call.1} parent=1 // pred_region
      %s39 = ssub.s32 256, 256
      %40 = vsyncadd [#allocation4], %s39
      %s42 = sshll.u32 [#allocation5], 4
      %s43 = int_to_ptr.vmem [resolvable:$true] %s42
      %45 = dma.vmem_to_hbm [thread:$0]  %s43, 256, %s2, [#allocation4]
    $region17: #{tpu_custom_call.1} parent=1 // pred_fallthru
      _
    // Predicated region
    $region18: #{tpu_custom_call.1} parent=1 // pred_check
      _
    $region19: #{tpu_custom_call.1} parent=1 // pred_check_branch
      %47 = sbr.rel (0) target = $region21
    $region20: #{tpu_custom_call.1} parent=1 // pred_region
      %48 = dma.done [#allocation4], 256
    $region21: #{tpu_custom_call.1} parent=1 // pred_fallthru
      _
    %49 = vsyncpa [#allocation3], 1
    %50 = vsyncpa [#allocation4], 1

</llo_original>
